<compile_context>
chip_gen: v6e
topology: v6e:2x2x1
jax: 0.10.0
libtpu: 0.0.40
codegen_flags: <defaults>
</compile_context>

<pallas_src>
import jax
import jax.numpy as jnp
from jax.experimental import pallas as pl
from jax.experimental.pallas import tpu as pltpu


_V_CHUNK = 2048  # V-chunk width for the one-hot: caps its VMEM at V_CHUNK*TN*4 B


def _gather_sigmoid_kernel(ids_ref, table_t_ref, out_ref):
    # ids_ref    : (1, TN)      int32  token ids for this tile (lane-dense)
    # table_t_ref: (O_pad, V)   f32    folded logit table (grid-invariant)
    # out_ref    : (O_pad, TN)  f32    sigmoid(logits), transposed (lane-dense stores)
    ids = ids_ref[...]                                        # (1, TN)
    o_pad, vocab = table_t_ref.shape
    tn = ids.shape[1]

    logits_t = jnp.zeros((o_pad, tn), jnp.float32)
    # Static chunking over V (fully unrolled at trace time; 1 chunk at small V).
    # Each chunk builds a (vb, TN) one-hot and accumulates its MXU contribution.
    for v0 in range(0, vocab, _V_CHUNK):
        vb = min(_V_CHUNK, vocab - v0)
        iota_v = jax.lax.broadcasted_iota(jnp.int32, (vb, tn), 0) + v0
        one_hot_t = (iota_v == ids).astype(jnp.float32)       # exact 0.0 / 1.0
        logits_t = logits_t + jnp.dot(
            table_t_ref[:, v0:v0 + vb],                       # static slice (no copy cost)
            one_hot_t,
            preferred_element_type=jnp.float32,
            precision=jax.lax.Precision.HIGHEST,              # exact row gather
        )
    out_ref[...] = jax.nn.sigmoid(logits_t)


def toxic_word_classifier(x, emb_table, fc_w, fc_b, *, tile_n=256):
    """Eval-mode forward pass.

    x         : [B, S] int32 token ids
    emb_table : [V, D] f32   nn.Embedding.weight
    fc_w      : [O, D] f32   nn.Linear.weight (PyTorch layout)
    fc_b      : [O]    f32   nn.Linear.bias
    returns   : [B, S, O] f32
    """
    B, S = x.shape
    V, D = emb_table.shape
    O = fc_w.shape[0]
    N = B * S

    # ---- fold fc (+bias) into a transposed [O, V] logit table, in plain XLA.
    # Contract on D directly (no explicit [V,D] transpose pass, no extra launch).
    table_t = (
        jnp.einsum("od,vd->ov", fc_w, emb_table,
                   precision=jax.lax.Precision.HIGHEST)
        + fc_b[:, None]
    ).astype(jnp.float32)

    # Pad O up to a full 8-sublane tile so kernel stores are unmasked vst.
    o_pad = max(8, pl.cdiv(O, 8) * 8)
    if o_pad != O:
        table_t = jnp.pad(table_t, ((0, o_pad - O), (0, 0)))

    # ---- right-size the token tile: multiple of 128, no larger than needed.
    tile_n = min(tile_n, pl.cdiv(N, 128) * 128)
    n_pad = pl.cdiv(N, tile_n) * tile_n

    ids = x.reshape(1, N).astype(jnp.int32)
    if n_pad != N:
        # pad with token id 0 (valid); padded columns are sliced off below.
        ids = jnp.pad(ids, ((0, 0), (0, n_pad - N)))

    out_t = pl.pallas_call(
        _gather_sigmoid_kernel,
        out_shape=jax.ShapeDtypeStruct((o_pad, n_pad), jnp.float32),
        grid=(n_pad // tile_n,),
        in_specs=[
            pl.BlockSpec((1, tile_n), lambda i: (0, i)),   # ids tile (lane-dense)
            pl.BlockSpec((o_pad, V), lambda i: (0, 0)),    # folded table, grid-invariant
        ],
        out_specs=pl.BlockSpec((o_pad, tile_n), lambda i: (0, i)),
        compiler_params=pltpu.CompilerParams(
            dimension_semantics=("parallel",),  # shards across v7x's 2 TCs when >1 step
        ),
    )(ids, table_t)

    # layout plumbing back to the PyTorch output shape [B, S, O]
    return out_t[:O, :N].T.reshape(B, S, O)


if __name__ == "__main__":
    # Small deterministic config consistent with the module's constructor.
    vocab_size, embedding_dim, output_dim = 64, 32, 4
    B, S = 2, 8

    key = jax.random.PRNGKey(0)
    k_emb, k_w, k_b, k_x = jax.random.split(key, 4)

    # nn.Embedding default init: N(0, 1)
    emb_table = jax.random.normal(k_emb, (vocab_size, embedding_dim), jnp.float32)
    # nn.Linear default init: U(-1/sqrt(D), 1/sqrt(D))
    bound = 1.0 / (embedding_dim ** 0.5)
    fc_w = jax.random.uniform(k_w, (output_dim, embedding_dim), jnp.float32,
                              minval=-bound, maxval=bound)   # PyTorch layout [O, D]
    fc_b = jax.random.uniform(k_b, (output_dim,), jnp.float32,
                              minval=-bound, maxval=bound)

    x = jax.random.randint(k_x, (B, S), 0, vocab_size, dtype=jnp.int32)

    out = toxic_word_classifier(x, emb_table, fc_w, fc_b)
    out = jax.block_until_ready(out)

    # Pure-JAX reference (eval-mode dropout = identity)
    ref = jax.nn.sigmoid(emb_table[x] @ fc_w.T + fc_b)
    assert out.shape == (B, S, output_dim)
    assert jnp.allclose(out, ref, atol=1e-5, rtol=1e-5), "mismatch vs reference"

    print("KERNEL_OK")
</pallas_src>

<mosaic_0001>
module attributes {stable_mosaic.version = 11 : i64} {
  func.func @_gather_sigmoid_kernel(%arg0: i32, %arg1: memref<1x128xi32, #tpu.memory_space<vmem>>, %arg2: memref<8x64xf32, #tpu.memory_space<vmem>>, %arg3: memref<8x128xf32, #tpu.memory_space<vmem>>) attributes {dimension_semantics = [#tpu.dimension_semantics<parallel>], iteration_bounds = array<i64: 1>, scalar_prefetch = 0 : i64, scratch_operands = 0 : i64, tpu.core_type = #tpu.core_type<tc>, window_params = [{transform_indices = @transform_0, window_bounds = array<i64: 1, 128>}, {pipeline_mode = #tpu.pipeline_mode<synchronous>, transform_indices = @transform_1, window_bounds = array<i64: 8, 64>}, {transform_indices = @transform_2, window_bounds = array<i64: 8, 128>}]} {
    %c0 = arith.constant 0 : index
    %c0_0 = arith.constant 0 : index
    %0 = vector.load %arg1[%c0, %c0_0] : memref<1x128xi32, #tpu.memory_space<vmem>>, vector<1x128xi32>
    %cst = arith.constant 0.000000e+00 : f32
    %1 = vector.broadcast %cst : f32 to vector<8x128xf32>
    %2 = tpu.iota {dimensions = array<i32: 0>} : vector<64x128xi32>
    %c0_i32 = arith.constant 0 : i32
    %3 = vector.broadcast %c0_i32 : i32 to vector<64x128xi32>
    %4 = arith.addi %2, %3 : vector<64x128xi32>
    %5 = vector.broadcast %0 : vector<1x128xi32> to vector<64x128xi32>
    %6 = arith.cmpi eq, %4, %5 : vector<64x128xi32>
    %7 = arith.extui %6 : vector<64x128xi1> to vector<64x128xi32>
    %8 = arith.sitofp %7 : vector<64x128xi32> to vector<64x128xf32>
    %c0_1 = arith.constant 0 : index
    %c0_2 = arith.constant 0 : index
    %9 = vector.load %arg2[%c0_1, %c0_2] : memref<8x64xf32, #tpu.memory_space<vmem>>, vector<8x64xf32>
    %cst_3 = arith.constant dense<0.000000e+00> : vector<8x128xf32>
    %10 = tpu.matmul %9, %8, %cst_3 {dimension_numbers = #tpu.dot_dimension_numbers<[1], [0], [0], [1], [0, 0, 1, 1], [], []>, precision = #tpu.contract_precision<fp32>} : vector<8x64xf32>, vector<64x128xf32>, vector<8x128xf32> -> vector<8x128xf32>
    %11 = arith.addf %1, %10 : vector<8x128xf32>
    %12 = arith.negf %11 : vector<8x128xf32>
    %13 = math.exp %12 : vector<8x128xf32>
    %cst_4 = arith.constant 1.000000e+00 : f32
    %14 = vector.broadcast %cst_4 : f32 to vector<8x128xf32>
    %15 = arith.addf %14, %13 : vector<8x128xf32>
    %16 = arith.divf %14, %15 : vector<8x128xf32>
    %c0_5 = arith.constant 0 : index
    %c0_6 = arith.constant 0 : index
    %17 = vector.load %arg3[%c0_5, %c0_6] : memref<8x128xf32, #tpu.memory_space<vmem>>, vector<8x128xf32>
    tpu.vector_store %arg3[%c0_5, %c0_6], %16 {strides = array<i32>} : memref<8x128xf32, #tpu.memory_space<vmem>>, vector<8x128xf32>,
    return
  }
  func.func @transform_0(%arg0: i32) -> (i32, i32) {
    %c0_i32 = arith.constant 0 : i32
    %c0_i32_0 = arith.constant 0 : i32
    return %c0_i32, %arg0 : i32, i32
  }
  func.func @transform_1(%arg0: i32) -> (i32, i32) {
    %c0_i32 = arith.constant 0 : i32
    %c0_i32_0 = arith.constant 0 : i32
    %c0_i32_1 = arith.constant 0 : i32
    return %c0_i32, %c0_i32_0 : i32, i32
  }
  func.func @transform_2(%arg0: i32) -> (i32, i32) {
    %c0_i32 = arith.constant 0 : i32
    %c0_i32_0 = arith.constant 0 : i32
    return %c0_i32, %arg0 : i32, i32
  }
}

</mosaic_0001>

<llo_original>
// kernel: tpu_custom_call.1
$region0: #{tpu_custom_call.1}
  #allocation0 [shape = 'u32[]', space=smem, size = 0x4, offset = 0x4, fixed_abs, tag = 'smem constant byte address 0x4 - core index']
  #allocation1 [shape = 'u32[144,128]{1,0:T(1,128)}', space=vmem, size = 0x12000, scoped, tag = 'internal scratch']
  %s0 = inlined_call_operand.hbm [shape: s32[1,128], index: 0, kind: input, shape index: {}]
  %s1 = inlined_call_operand.hbm [shape: f32[8,64], index: 1, kind: input, shape index: {}]
  %s2 = inlined_call_operand.hbm [shape: f32[8,128], index: 2, kind: output, shape index: {}]
  %s3 = sld [smem:[#allocation0]]
  $region26: #{tpu_custom_call.1} parent=0
    _
  %s5 = ssub.s32 1, %s3
  %s6 = scalar_select 0, %s5, %s3
  $region1: #{tpu_custom_call.1} parent=0
    #allocation2 [shape = 'u8[512]{0}', space=vmem, size = 0x400, scoped, tag = 'input window, operand 0, single buffered']
    #allocation3 [shape = 's32[1]{0}', space=sflag, size = 0x4, scoped, tag = 'scoped memory for tpu_custom_call.1']
    #allocation4 [shape = 's32[1]{0}', space=sflag, size = 0x4, scoped, tag = 'scoped memory for tpu_custom_call.1']
    #allocation5 [shape = 'u8[4096]{0}', space=vmem, size = 0x1000, scoped, tag = 'input window, operand 1, single buffered']
    #allocation6 [shape = 's32[1]{0}', space=sflag, size = 0x4, scoped, tag = 'scoped memory for tpu_custom_call.1']
    #allocation7 [shape = 'u8[4096]{0}', space=vmem, size = 0x1000, scoped, tag = 'output window, operand 0, single buffered']
    %7 = vsyncpa [#allocation3], 0
    %8 = vsyncpa [#allocation6], 0
    %9 = vsyncpa [#allocation4], 0
    // Predicated region
    $region2: #{tpu_custom_call.1} parent=1 // pred_check
      _
    $region3: #{tpu_custom_call.1} parent=1 // pred_check_branch
      %11 = sbr.rel (0) target = $region5
    $region4: #{tpu_custom_call.1} parent=1 // pred_region
      %s13 = ssub.s32 16, 16
      %14 = vsyncadd [#allocation3], %s13
      %s16 = sshll.u32 [#allocation2], 4
      %s17 = int_to_ptr.vmem [resolvable:$true] %s16
      %19 = dma.hbm_to_vmem [thread:$0]  %s0, 16, %s17, [#allocation3]
    $region5: #{tpu_custom_call.1} parent=1 // pred_fallthru
      _
    // Predicated region
    $region6: #{tpu_custom_call.1} parent=1 // pred_check
      _
    $region7: #{tpu_custom_call.1} parent=1 // pred_check_branch
      %21 = sbr.rel (0) target = $region9
    $region8: #{tpu_custom_call.1} parent=1 // pred_region
      %s23 = ssub.s32 128, 128
      %24 = vsyncadd [#allocation6], %s23
      %s26 = sshll.u32 [#allocation5], 4
      %s27 = int_to_ptr.vmem [resolvable:$true] %s26
      %29 = dma.hbm_to_vmem [thread:$0]  %s1, 128, %s27, [#allocation6]
    $region9: #{tpu_custom_call.1} parent=1 // pred_fallthru
      _
    // Predicated region
    $region10: #{tpu_custom_call.1} parent=1 // pred_check
      _
    $region11: #{tpu_custom_call.1} parent=1 // pred_check_branch
      %31 = sbr.rel (0) target = $region13
    $region12: #{tpu_custom_call.1} parent=1 // pred_region
      %32 = dma.done [#allocation3], 16
    $region13: #{tpu_custom_call.1} parent=1 // pred_fallthru
      _
    // Predicated region
    $region14: #{tpu_custom_call.1} parent=1 // pred_check
      _
    $region15: #{tpu_custom_call.1} parent=1 // pred_check_branch
      %34 = sbr.rel (0) target = $region17
    $region16: #{tpu_custom_call.1} parent=1 // pred_region
      %35 = dma.done [#allocation6], 128
    $region17: #{tpu_custom_call.1} parent=1 // pred_fallthru
      _
    %v36 = vld [vmem:[#allocation2] sm:$0x1]
    %v37 = vlaneseq
    %v38 = vshrl.u32 %v37, 7
    %v39 = vadd.s32 %v38, 8
    %v40 = vadd.s32 %v38, 16
    %v41 = vadd.s32 %v38, 24
    %v42 = vadd.s32 %v38, 32
    %v43 = vadd.s32 %v38, 40
    %v44 = vadd.s32 %v38, 48
    %v45 = vadd.s32 %v38, 56
    %v46 = vlaneseq
    %v47 = vshrl.u32 %v46, 7
    %v48 = vsub.s32 0, %v47
    %v49 = vrot.slane %v36, %v48
    %vm50 = vcmp.eq.s32.totalorder %v38, %v49
    %vm51 = vcmp.eq.s32.totalorder %v39, %v49
    %vm52 = vcmp.eq.s32.totalorder %v40, %v49
    %vm53 = vcmp.eq.s32.totalorder %v41, %v49
    %vm54 = vcmp.eq.s32.totalorder %v42, %v49
    %vm55 = vcmp.eq.s32.totalorder %v43, %v49
    %vm56 = vcmp.eq.s32.totalorder %v44, %v49
    %vm57 = vcmp.eq.s32.totalorder %v45, %v49
    %v58 = vsel %vm50, 1, 0
    %v59 = vsel %vm51, 1, 0
    %v60 = vsel %vm52, 1, 0
    %v61 = vsel %vm53, 1, 0
    %v62 = vsel %vm54, 1, 0
    %v63 = vsel %vm55, 1, 0
    %v64 = vsel %vm56, 1, 0
    %v65 = vsel %vm57, 1, 0
    %v66 = vcvt.s32.f32 %v58
    %v67 = vcvt.s32.f32 %v59
    %v68 = vcvt.s32.f32 %v60
    %v69 = vcvt.s32.f32 %v61
    %v70 = vcvt.s32.f32 %v62
    %v71 = vcvt.s32.f32 %v63
    %v72 = vcvt.s32.f32 %v64
    %v73 = vcvt.s32.f32 %v65
    %v74 = vld [vmem:[#allocation5] sm:$0xff]
    %vm75 = vcmask 523264
    %v77 = vsel %vm75, %v74, 0
    %79 = vmatprep.subr.mxu0 0.0
    %80 = vmatpush1.msra.mxu0 0.0
    %81 = vmatprep.subr.mxu0 0.0
    %82 = vmatpush1.msra.mxu0 0.0
    %83 = vmatprep.subr.mxu0 0.0
    %84 = vmatpush1.msra.mxu0 0.0
    %85 = vmatprep.subr.mxu0 0.0
    %86 = vmatpush1.msra.mxu0 0.0
    %87 = vmatprep.subr.mxu0 0.0
    %88 = vmatpush1.msra.mxu0 0.0
    %89 = vmatprep.subr.mxu0 0.0
    %90 = vmatpush1.msra.mxu0 0.0
    %91 = vmatprep.subr.mxu0 0.0
    %92 = vmatpush1.msra.mxu0 0.0
    %93 = vmatprep.subr.mxu0 0.0
    %94 = vmatpush1.msra.mxu0 0.0
    %95 = vmatprep.subr.mxu0 0.0
    %v96 = vand.u32 %v73, 4294901760
    %97 = vmatpush1.msra.mxu0 %v96
    %98 = vmatprep.subr.mxu0 0.0
    %v99 = vand.u32 %v72, 4294901760
    %100 = vmatpush1.msra.mxu0 %v99
    %101 = vmatprep.subr.mxu0 0.0
    %v102 = vand.u32 %v71, 4294901760
    %103 = vmatpush1.msra.mxu0 %v102
    %104 = vmatprep.subr.mxu0 0.0
    %v105 = vand.u32 %v70, 4294901760
    %106 = vmatpush1.msra.mxu0 %v105
    %107 = vmatprep.subr.mxu0 0.0
    %v108 = vand.u32 %v69, 4294901760
    %109 = vmatpush1.msra.mxu0 %v108
    %110 = vmatprep.subr.mxu0 0.0
    %v111 = vand.u32 %v68, 4294901760
    %112 = vmatpush1.msra.mxu0 %v111
    %113 = vmatprep.subr.mxu0 0.0
    %v114 = vand.u32 %v67, 4294901760
    %115 = vmatpush1.msra.mxu0 %v114
    %116 = vmatprep.subr.mxu0 0.0
    %v117 = vand.u32 %v66, 4294901760
    %118 = vmatpush1.msra.mxu0 %v117
    %119 = vmatprep.subr.mxu0 0.0
    %120 = vmatpush2.msra.mxu0 0.0
    %121 = vmatprep.subr.mxu0 0.0
    %122 = vmatpush2.msra.mxu0 0.0
    %123 = vmatprep.subr.mxu0 0.0
    %124 = vmatpush2.msra.mxu0 0.0
    %125 = vmatprep.subr.mxu0 0.0
    %126 = vmatpush2.msra.mxu0 0.0
    %127 = vmatprep.subr.mxu0 0.0
    %128 = vmatpush2.msra.mxu0 0.0
    %129 = vmatprep.subr.mxu0 0.0
    %130 = vmatpush2.msra.mxu0 0.0
    %131 = vmatprep.subr.mxu0 0.0
    %132 = vmatpush2.msra.mxu0 0.0
    %133 = vmatprep.subr.mxu0 0.0
    %134 = vmatpush2.msra.mxu0 0.0
    %135 = vmatprep.subr.mxu0 0.0
    %136 = vmatpush2.msra.mxu0 0.0
    %137 = vmatprep.subr.mxu0 0.0
    %138 = vmatpush2.msra.mxu0 0.0
    %139 = vmatprep.subr.mxu0 0.0
    %140 = vmatpush2.msra.mxu0 0.0
    %141 = vmatprep.subr.mxu0 0.0
    %142 = vmatpush2.msra.mxu0 0.0
    %143 = vmatprep.subr.mxu0 0.0
    %144 = vmatpush2.msra.mxu0 0.0
    %145 = vmatprep.subr.mxu0 0.0
    %146 = vmatpush2.msra.mxu0 0.0
    %147 = vmatprep.subr.mxu0 0.0
    %148 = vmatpush2.msra.mxu0 0.0
    %149 = vmatprep.subr.mxu0 0.0
    %150 = vmatpush2.msra.mxu0 0.0
    %151 = vmatprep.mubr.f32.mxu0 0.0
    %v152 = vand.u32 %v77, 4294901760
    %v153 = vsub.f32 %v77, %v152
    %v154 = vand.u32 %v153, 4294901760
    %v155 = vsub.f32 %v153, %v154
    %v156 = vand.u32 %v155, 4294901760
    %157 = vmatmul.mubr.f32.gmra.mxu0 %v156
    %v158 = vpop.f32.mrf.mxu0
    %v159 = vadd.f32 0.0, %v158
    %v160 = vpop.f32.mrf.mxu0
    %161 = vdwg.mxu0
    %162 = vmatprep.subr.mxu0 0.0
    %163 = vmatpush1.msra.mxu0 0.0
    %164 = vmatprep.subr.mxu0 0.0
    %165 = vmatpush1.msra.mxu0 0.0
    %166 = vmatprep.subr.mxu0 0.0
    %167 = vmatpush1.msra.mxu0 0.0
    %168 = vmatprep.subr.mxu0 0.0
    %169 = vmatpush1.msra.mxu0 0.0
    %170 = vmatprep.subr.mxu0 0.0
    %171 = vmatpush1.msra.mxu0 0.0
    %172 = vmatprep.subr.mxu0 0.0
    %173 = vmatpush1.msra.mxu0 0.0
    %174 = vmatprep.subr.mxu0 0.0
    %175 = vmatpush1.msra.mxu0 0.0
    %176 = vmatprep.subr.mxu0 0.0
    %177 = vmatpush1.msra.mxu0 0.0
    %178 = vmatprep.subr.mxu0 0.0
    %v179 = vand.u32 %v73, 4294901760
    %v180 = vsub.f32 %v73, %v179
    %v181 = vand.u32 %v180, 4294901760
    %v182 = vsub.f32 %v180, %v181
    %v183 = vand.u32 %v182, 4294901760
    %184 = vmatpush1.msra.mxu0 %v183
    %185 = vmatprep.subr.mxu0 0.0
    %v186 = vand.u32 %v72, 4294901760
    %v187 = vsub.f32 %v72, %v186
    %v188 = vand.u32 %v187, 4294901760
    %v189 = vsub.f32 %v187, %v188
    %v190 = vand.u32 %v189, 4294901760
    %191 = vmatpush1.msra.mxu0 %v190
    %192 = vmatprep.subr.mxu0 0.0
    %v193 = vand.u32 %v71, 4294901760
    %v194 = vsub.f32 %v71, %v193
    %v195 = vand.u32 %v194, 4294901760
    %v196 = vsub.f32 %v194, %v195
    %v197 = vand.u32 %v196, 4294901760
    %198 = vmatpush1.msra.mxu0 %v197
    %199 = vmatprep.subr.mxu0 0.0
    %v200 = vand.u32 %v70, 4294901760
    %v201 = vsub.f32 %v70, %v200
    %v202 = vand.u32 %v201, 4294901760
    %v203 = vsub.f32 %v201, %v202
    %v204 = vand.u32 %v203, 4294901760
    %205 = vmatpush1.msra.mxu0 %v204
    %206 = vmatprep.subr.mxu0 0.0
    %v207 = vand.u32 %v69, 4294901760
    %v208 = vsub.f32 %v69, %v207
    %v209 = vand.u32 %v208, 4294901760
    %v210 = vsub.f32 %v208, %v209
    %v211 = vand.u32 %v210, 4294901760
    %212 = vmatpush1.msra.mxu0 %v211
    %213 = vmatprep.subr.mxu0 0.0
    %v214 = vand.u32 %v68, 4294901760
    %v215 = vsub.f32 %v68, %v214
    %v216 = vand.u32 %v215, 4294901760
    %v217 = vsub.f32 %v215, %v216
    %v218 = vand.u32 %v217, 4294901760
    %219 = vmatpush1.msra.mxu0 %v218
    %220 = vmatprep.subr.mxu0 0.0
    %v221 = vand.u32 %v67, 4294901760
    %v222 = vsub.f32 %v67, %v221
    %v223 = vand.u32 %v222, 4294901760
    %v224 = vsub.f32 %v222, %v223
    %v225 = vand.u32 %v224, 4294901760
    %226 = vmatpush1.msra.mxu0 %v225
    %227 = vmatprep.subr.mxu0 0.0
    %v228 = vand.u32 %v66, 4294901760
    %v229 = vsub.f32 %v66, %v228
    %v230 = vand.u32 %v229, 4294901760
    %v231 = vsub.f32 %v229, %v230
    %v232 = vand.u32 %v231, 4294901760
    %233 = vmatpush1.msra.mxu0 %v232
    %234 = vmatprep.subr.mxu0 0.0
    %235 = vmatpush2.msra.mxu0 0.0
    %236 = vmatprep.subr.mxu0 0.0
    %237 = vmatpush2.msra.mxu0 0.0
    %238 = vmatprep.subr.mxu0 0.0
    %239 = vmatpush2.msra.mxu0 0.0
    %240 = vmatprep.subr.mxu0 0.0
    %241 = vmatpush2.msra.mxu0 0.0
    %242 = vmatprep.subr.mxu0 0.0
    %243 = vmatpush2.msra.mxu0 0.0
    %244 = vmatprep.subr.mxu0 0.0
    %245 = vmatpush2.msra.mxu0 0.0
    %246 = vmatprep.subr.mxu0 0.0
    %247 = vmatpush2.msra.mxu0 0.0
    %248 = vmatprep.subr.mxu0 0.0
    %249 = vmatpush2.msra.mxu0 0.0
    %250 = vmatprep.subr.mxu0 0.0
    %251 = vmatpush2.msra.mxu0 0.0
    %252 = vmatprep.subr.mxu0 0.0
    %253 = vmatpush2.msra.mxu0 0.0
    %254 = vmatprep.subr.mxu0 0.0
    %255 = vmatpush2.msra.mxu0 0.0
    %256 = vmatprep.subr.mxu0 0.0
    %257 = vmatpush2.msra.mxu0 0.0
    %258 = vmatprep.subr.mxu0 0.0
    %259 = vmatpush2.msra.mxu0 0.0
    %260 = vmatprep.subr.mxu0 0.0
    %261 = vmatpush2.msra.mxu0 0.0
    %262 = vmatprep.subr.mxu0 0.0
    %263 = vmatpush2.msra.mxu0 0.0
    %264 = vmatprep.subr.mxu0 0.0
    %265 = vmatpush2.msra.mxu0 0.0
    %266 = vmatprep.mubr.f32.mxu0 0.0
    %v267 = vand.u32 %v77, 4294901760
    %268 = vmatmul.mubr.f32.gmra.mxu0 %v267
    %v269 = vpop.f32.mrf.mxu0
    %v270 = vadd.f32 %v159, %v269
    %v271 = vpop.f32.mrf.mxu0
    %272 = vdwg.mxu0
    %273 = vmatprep.subr.mxu0 0.0
    %274 = vmatpush1.msra.mxu0 0.0
    %275 = vmatprep.subr.mxu0 0.0
    %276 = vmatpush1.msra.mxu0 0.0
    %277 = vmatprep.subr.mxu0 0.0
    %278 = vmatpush1.msra.mxu0 0.0
    %279 = vmatprep.subr.mxu0 0.0
    %280 = vmatpush1.msra.mxu0 0.0
    %281 = vmatprep.subr.mxu0 0.0
    %282 = vmatpush1.msra.mxu0 0.0
    %283 = vmatprep.subr.mxu0 0.0
    %284 = vmatpush1.msra.mxu0 0.0
    %285 = vmatprep.subr.mxu0 0.0
    %286 = vmatpush1.msra.mxu0 0.0
    %287 = vmatprep.subr.mxu0 0.0
    %288 = vmatpush1.msra.mxu0 0.0
    %289 = vmatprep.subr.mxu0 0.0
    %v290 = vand.u32 %v73, 4294901760
    %v291 = vsub.f32 %v73, %v290
    %292 = vmatpush1.msra.mxu0 %v291
    %293 = vmatprep.subr.mxu0 0.0
    %v294 = vand.u32 %v72, 4294901760
    %v295 = vsub.f32 %v72, %v294
    %296 = vmatpush1.msra.mxu0 %v295
    %297 = vmatprep.subr.mxu0 0.0
    %v298 = vand.u32 %v71, 4294901760
    %v299 = vsub.f32 %v71, %v298
    %300 = vmatpush1.msra.mxu0 %v299
    %301 = vmatprep.subr.mxu0 0.0
    %v302 = vand.u32 %v70, 4294901760
    %v303 = vsub.f32 %v70, %v302
    %304 = vmatpush1.msra.mxu0 %v303
    %305 = vmatprep.subr.mxu0 0.0
    %v306 = vand.u32 %v69, 4294901760
    %v307 = vsub.f32 %v69, %v306
    %308 = vmatpush1.msra.mxu0 %v307
    %309 = vmatprep.subr.mxu0 0.0
    %v310 = vand.u32 %v68, 4294901760
    %v311 = vsub.f32 %v68, %v310
    %312 = vmatpush1.msra.mxu0 %v311
    %313 = vmatprep.subr.mxu0 0.0
    %v314 = vand.u32 %v67, 4294901760
    %v315 = vsub.f32 %v67, %v314
    %316 = vmatpush1.msra.mxu0 %v315
    %317 = vmatprep.subr.mxu0 0.0
    %v318 = vand.u32 %v66, 4294901760
    %v319 = vsub.f32 %v66, %v318
    %320 = vmatpush1.msra.mxu0 %v319
    %321 = vmatprep.subr.mxu0 0.0
    %322 = vmatpush2.msra.mxu0 0.0
    %323 = vmatprep.subr.mxu0 0.0
    %324 = vmatpush2.msra.mxu0 0.0
    %325 = vmatprep.subr.mxu0 0.0
    %326 = vmatpush2.msra.mxu0 0.0
    %327 = vmatprep.subr.mxu0 0.0
    %328 = vmatpush2.msra.mxu0 0.0
    %329 = vmatprep.subr.mxu0 0.0
    %330 = vmatpush2.msra.mxu0 0.0
    %331 = vmatprep.subr.mxu0 0.0
    %332 = vmatpush2.msra.mxu0 0.0
    %333 = vmatprep.subr.mxu0 0.0
    %334 = vmatpush2.msra.mxu0 0.0
    %335 = vmatprep.subr.mxu0 0.0
    %336 = vmatpush2.msra.mxu0 0.0
    %337 = vmatprep.subr.mxu0 0.0
    %338 = vmatpush2.msra.mxu0 0.0
    %339 = vmatprep.subr.mxu0 0.0
    %340 = vmatpush2.msra.mxu0 0.0
    %341 = vmatprep.subr.mxu0 0.0
    %342 = vmatpush2.msra.mxu0 0.0
    %343 = vmatprep.subr.mxu0 0.0
    %344 = vmatpush2.msra.mxu0 0.0
    %345 = vmatprep.subr.mxu0 0.0
    %346 = vmatpush2.msra.mxu0 0.0
    %347 = vmatprep.subr.mxu0 0.0
    %348 = vmatpush2.msra.mxu0 0.0
    %349 = vmatprep.subr.mxu0 0.0
    %350 = vmatpush2.msra.mxu0 0.0
    %351 = vmatprep.subr.mxu0 0.0
    %352 = vmatpush2.msra.mxu0 0.0
    %353 = vmatprep.mubr.f32.mxu0 0.0
    %v354 = vand.u32 %v77, 4294901760
    %v355 = vsub.f32 %v77, %v354
    %356 = vmatmul.mubr.f32.gmra.mxu0 %v355
    %v357 = vpop.f32.mrf.mxu0
    %v358 = vadd.f32 %v270, %v357
    %v359 = vpop.f32.mrf.mxu0
    %360 = vdwg.mxu0
    %361 = vmatprep.subr.mxu0 0.0
    %362 = vmatpush1.msra.mxu0 0.0
    %363 = vmatprep.subr.mxu0 0.0
    %364 = vmatpush1.msra.mxu0 0.0
    %365 = vmatprep.subr.mxu0 0.0
    %366 = vmatpush1.msra.mxu0 0.0
    %367 = vmatprep.subr.mxu0 0.0
    %368 = vmatpush1.msra.mxu0 0.0
    %369 = vmatprep.subr.mxu0 0.0
    %370 = vmatpush1.msra.mxu0 0.0
    %371 = vmatprep.subr.mxu0 0.0
    %372 = vmatpush1.msra.mxu0 0.0
    %373 = vmatprep.subr.mxu0 0.0
    %374 = vmatpush1.msra.mxu0 0.0
    %375 = vmatprep.subr.mxu0 0.0
    %376 = vmatpush1.msra.mxu0 0.0
    %377 = vmatprep.subr.mxu0 0.0
    %v378 = vand.u32 %v73, 4294901760
    %379 = vmatpush1.msra.mxu0 %v378
    %380 = vmatprep.subr.mxu0 0.0
    %v381 = vand.u32 %v72, 4294901760
    %382 = vmatpush1.msra.mxu0 %v381
    %383 = vmatprep.subr.mxu0 0.0
    %v384 = vand.u32 %v71, 4294901760
    %385 = vmatpush1.msra.mxu0 %v384
    %386 = vmatprep.subr.mxu0 0.0
    %v387 = vand.u32 %v70, 4294901760
    %388 = vmatpush1.msra.mxu0 %v387
    %389 = vmatprep.subr.mxu0 0.0
    %v390 = vand.u32 %v69, 4294901760
    %391 = vmatpush1.msra.mxu0 %v390
    %392 = vmatprep.subr.mxu0 0.0
    %v393 = vand.u32 %v68, 4294901760
    %394 = vmatpush1.msra.mxu0 %v393
    %395 = vmatprep.subr.mxu0 0.0
    %v396 = vand.u32 %v67, 4294901760
    %397 = vmatpush1.msra.mxu0 %v396
    %398 = vmatprep.subr.mxu0 0.0
    %v399 = vand.u32 %v66, 4294901760
    %400 = vmatpush1.msra.mxu0 %v399
    %401 = vmatprep.subr.mxu0 0.0
    %402 = vmatpush2.msra.mxu0 0.0
    %403 = vmatprep.subr.mxu0 0.0
    %404 = vmatpush2.msra.mxu0 0.0
    %405 = vmatprep.subr.mxu0 0.0
    %406 = vmatpush2.msra.mxu0 0.0
    %407 = vmatprep.subr.mxu0 0.0
    %408 = vmatpush2.msra.mxu0 0.0
    %409 = vmatprep.subr.mxu0 0.0
    %410 = vmatpush2.msra.mxu0 0.0
    %411 = vmatprep.subr.mxu0 0.0
    %412 = vmatpush2.msra.mxu0 0.0
    %413 = vmatprep.subr.mxu0 0.0
    %414 = vmatpush2.msra.mxu0 0.0
    %415 = vmatprep.subr.mxu0 0.0
    %416 = vmatpush2.msra.mxu0 0.0
    %417 = vmatprep.subr.mxu0 0.0
    %418 = vmatpush2.msra.mxu0 0.0
    %419 = vmatprep.subr.mxu0 0.0
    %420 = vmatpush2.msra.mxu0 0.0
    %421 = vmatprep.subr.mxu0 0.0
    %422 = vmatpush2.msra.mxu0 0.0
    %423 = vmatprep.subr.mxu0 0.0
    %424 = vmatpush2.msra.mxu0 0.0
    %425 = vmatprep.subr.mxu0 0.0
    %426 = vmatpush2.msra.mxu0 0.0
    %427 = vmatprep.subr.mxu0 0.0
    %428 = vmatpush2.msra.mxu0 0.0
    %429 = vmatprep.subr.mxu0 0.0
    %430 = vmatpush2.msra.mxu0 0.0
    %431 = vmatprep.subr.mxu0 0.0
    %432 = vmatpush2.msra.mxu0 0.0
    %433 = vmatprep.mubr.f32.mxu0 0.0
    %v434 = vand.u32 %v77, 4294901760
    %v435 = vsub.f32 %v77, %v434
    %v436 = vand.u32 %v435, 4294901760
    %437 = vmatmul.mubr.f32.gmra.mxu0 %v436
    %v438 = vpop.f32.mrf.mxu0
    %v439 = vadd.f32 %v358, %v438
    %v440 = vpop.f32.mrf.mxu0
    %441 = vdwg.mxu0
    %442 = vmatprep.subr.mxu0 0.0
    %443 = vmatpush1.msra.mxu0 0.0
    %444 = vmatprep.subr.mxu0 0.0
    %445 = vmatpush1.msra.mxu0 0.0
    %446 = vmatprep.subr.mxu0 0.0
    %447 = vmatpush1.msra.mxu0 0.0
    %448 = vmatprep.subr.mxu0 0.0
    %449 = vmatpush1.msra.mxu0 0.0
    %450 = vmatprep.subr.mxu0 0.0
    %451 = vmatpush1.msra.mxu0 0.0
    %452 = vmatprep.subr.mxu0 0.0
    %453 = vmatpush1.msra.mxu0 0.0
    %454 = vmatprep.subr.mxu0 0.0
    %455 = vmatpush1.msra.mxu0 0.0
    %456 = vmatprep.subr.mxu0 0.0
    %457 = vmatpush1.msra.mxu0 0.0
    %458 = vmatprep.subr.mxu0 0.0
    %v459 = vand.u32 %v73, 4294901760
    %v460 = vsub.f32 %v73, %v459
    %v461 = vand.u32 %v460, 4294901760
    %462 = vmatpush1.msra.mxu0 %v461
    %463 = vmatprep.subr.mxu0 0.0
    %v464 = vand.u32 %v72, 4294901760
    %v465 = vsub.f32 %v72, %v464
    %v466 = vand.u32 %v465, 4294901760
    %467 = vmatpush1.msra.mxu0 %v466
    %468 = vmatprep.subr.mxu0 0.0
    %v469 = vand.u32 %v71, 4294901760
    %v470 = vsub.f32 %v71, %v469
    %v471 = vand.u32 %v470, 4294901760
    %472 = vmatpush1.msra.mxu0 %v471
    %473 = vmatprep.subr.mxu0 0.0
    %v474 = vand.u32 %v70, 4294901760
    %v475 = vsub.f32 %v70, %v474
    %v476 = vand.u32 %v475, 4294901760
    %477 = vmatpush1.msra.mxu0 %v476
    %478 = vmatprep.subr.mxu0 0.0
    %v479 = vand.u32 %v69, 4294901760
    %v480 = vsub.f32 %v69, %v479
    %v481 = vand.u32 %v480, 4294901760
    %482 = vmatpush1.msra.mxu0 %v481
    %483 = vmatprep.subr.mxu0 0.0
    %v484 = vand.u32 %v68, 4294901760
    %v485 = vsub.f32 %v68, %v484
    %v486 = vand.u32 %v485, 4294901760
    %487 = vmatpush1.msra.mxu0 %v486
    %488 = vmatprep.subr.mxu0 0.0
    %v489 = vand.u32 %v67, 4294901760
    %v490 = vsub.f32 %v67, %v489
    %v491 = vand.u32 %v490, 4294901760
    %492 = vmatpush1.msra.mxu0 %v491
    %493 = vmatprep.subr.mxu0 0.0
    %v494 = vand.u32 %v66, 4294901760
    %v495 = vsub.f32 %v66, %v494
    %v496 = vand.u32 %v495, 4294901760
    %497 = vmatpush1.msra.mxu0 %v496
    %498 = vmatprep.subr.mxu0 0.0
    %499 = vmatpush2.msra.mxu0 0.0
    %500 = vmatprep.subr.mxu0 0.0
    %501 = vmatpush2.msra.mxu0 0.0
    %502 = vmatprep.subr.mxu0 0.0
    %503 = vmatpush2.msra.mxu0 0.0
    %504 = vmatprep.subr.mxu0 0.0
    %505 = vmatpush2.msra.mxu0 0.0
    %506 = vmatprep.subr.mxu0 0.0
    %507 = vmatpush2.msra.mxu0 0.0
    %508 = vmatprep.subr.mxu0 0.0
    %509 = vmatpush2.msra.mxu0 0.0
    %510 = vmatprep.subr.mxu0 0.0
    %511 = vmatpush2.msra.mxu0 0.0
    %512 = vmatprep.subr.mxu0 0.0
    %513 = vmatpush2.msra.mxu0 0.0
    %514 = vmatprep.subr.mxu0 0.0
    %515 = vmatpush2.msra.mxu0 0.0
    %516 = vmatprep.subr.mxu0 0.0
    %517 = vmatpush2.msra.mxu0 0.0
    %518 = vmatprep.subr.mxu0 0.0
    %519 = vmatpush2.msra.mxu0 0.0
    %520 = vmatprep.subr.mxu0 0.0
    %521 = vmatpush2.msra.mxu0 0.0
    %522 = vmatprep.subr.mxu0 0.0
    %523 = vmatpush2.msra.mxu0 0.0
    %524 = vmatprep.subr.mxu0 0.0
    %525 = vmatpush2.msra.mxu0 0.0
    %526 = vmatprep.subr.mxu0 0.0
    %527 = vmatpush2.msra.mxu0 0.0
    %528 = vmatprep.subr.mxu0 0.0
    %529 = vmatpush2.msra.mxu0 0.0
    %530 = vmatprep.mubr.f32.mxu0 0.0
    %v531 = vand.u32 %v77, 4294901760
    %532 = vmatmul.mubr.f32.gmra.mxu0 %v531
    %v533 = vpop.f32.mrf.mxu0
    %v534 = vadd.f32 %v439, %v533
    %v535 = vpop.f32.mrf.mxu0
    %536 = vdwg.mxu0
    %537 = vmatprep.subr.mxu0 0.0
    %538 = vmatpush1.msra.mxu0 0.0
    %539 = vmatprep.subr.mxu0 0.0
    %540 = vmatpush1.msra.mxu0 0.0
    %541 = vmatprep.subr.mxu0 0.0
    %542 = vmatpush1.msra.mxu0 0.0
    %543 = vmatprep.subr.mxu0 0.0
    %544 = vmatpush1.msra.mxu0 0.0
    %545 = vmatprep.subr.mxu0 0.0
    %546 = vmatpush1.msra.mxu0 0.0
    %547 = vmatprep.subr.mxu0 0.0
    %548 = vmatpush1.msra.mxu0 0.0
    %549 = vmatprep.subr.mxu0 0.0
    %550 = vmatpush1.msra.mxu0 0.0
    %551 = vmatprep.subr.mxu0 0.0
    %552 = vmatpush1.msra.mxu0 0.0
    %553 = vmatprep.subr.mxu0 0.0
    %v554 = vand.u32 %v73, 4294901760
    %555 = vmatpush1.msra.mxu0 %v554
    %556 = vmatprep.subr.mxu0 0.0
    %v557 = vand.u32 %v72, 4294901760
    %558 = vmatpush1.msra.mxu0 %v557
    %559 = vmatprep.subr.mxu0 0.0
    %v560 = vand.u32 %v71, 4294901760
    %561 = vmatpush1.msra.mxu0 %v560
    %562 = vmatprep.subr.mxu0 0.0
    %v563 = vand.u32 %v70, 4294901760
    %564 = vmatpush1.msra.mxu0 %v563
    %565 = vmatprep.subr.mxu0 0.0
    %v566 = vand.u32 %v69, 4294901760
    %567 = vmatpush1.msra.mxu0 %v566
    %568 = vmatprep.subr.mxu0 0.0
    %v569 = vand.u32 %v68, 4294901760
    %570 = vmatpush1.msra.mxu0 %v569
    %571 = vmatprep.subr.mxu0 0.0
    %v572 = vand.u32 %v67, 4294901760
    %573 = vmatpush1.msra.mxu0 %v572
    %574 = vmatprep.subr.mxu0 0.0
    %v575 = vand.u32 %v66, 4294901760
    %576 = vmatpush1.msra.mxu0 %v575
    %577 = vmatprep.subr.mxu0 0.0
    %578 = vmatpush2.msra.mxu0 0.0
    %579 = vmatprep.subr.mxu0 0.0
    %580 = vmatpush2.msra.mxu0 0.0
    %581 = vmatprep.subr.mxu0 0.0
    %582 = vmatpush2.msra.mxu0 0.0
    %583 = vmatprep.subr.mxu0 0.0
    %584 = vmatpush2.msra.mxu0 0.0
    %585 = vmatprep.subr.mxu0 0.0
    %586 = vmatpush2.msra.mxu0 0.0
    %587 = vmatprep.subr.mxu0 0.0
    %588 = vmatpush2.msra.mxu0 0.0
    %589 = vmatprep.subr.mxu0 0.0
    %590 = vmatpush2.msra.mxu0 0.0
    %591 = vmatprep.subr.mxu0 0.0
    %592 = vmatpush2.msra.mxu0 0.0
    %593 = vmatprep.subr.mxu0 0.0
    %594 = vmatpush2.msra.mxu0 0.0
    %595 = vmatprep.subr.mxu0 0.0
    %596 = vmatpush2.msra.mxu0 0.0
    %597 = vmatprep.subr.mxu0 0.0
    %598 = vmatpush2.msra.mxu0 0.0
    %599 = vmatprep.subr.mxu0 0.0
    %600 = vmatpush2.msra.mxu0 0.0
    %601 = vmatprep.subr.mxu0 0.0
    %602 = vmatpush2.msra.mxu0 0.0
    %603 = vmatprep.subr.mxu0 0.0
    %604 = vmatpush2.msra.mxu0 0.0
    %605 = vmatprep.subr.mxu0 0.0
    %606 = vmatpush2.msra.mxu0 0.0
    %607 = vmatprep.subr.mxu0 0.0
    %608 = vmatpush2.msra.mxu0 0.0
    %609 = vmatprep.mubr.f32.mxu0 0.0
    %v610 = vand.u32 %v77, 4294901760
    %611 = vmatmul.mubr.f32.gmra.mxu0 %v610
    %v612 = vpop.f32.mrf.mxu0
    %v613 = vadd.f32 %v534, %v612
    %v614 = vpop.f32.mrf.mxu0
    %615 = vdwg.mxu0
    %v616 = vxor.u32 %v613, 2147483648
    %v617 = vmul.f32 %v616, 1.442695
    %v618 = vpow.pop %v617
    %v619 = vadd.f32 %v618, 1.0
    %v620 = vrcp.pop %v619
    %v621 = vmul.f32 1.0, %v620
    %622 = vst [vmem:[#allocation7] sm:$0xff] %v621
    // Predicated region
    $region18: #{tpu_custom_call.1} parent=1 // pred_check
      _
    $region19: #{tpu_custom_call.1} parent=1 // pred_check_branch
      %624 = sbr.rel (0) target = $region21
    $region20: #{tpu_custom_call.1} parent=1 // pred_region
      %s626 = ssub.s32 128, 128
      %627 = vsyncadd [#allocation4], %s626
      %s629 = sshll.u32 [#allocation7], 4
      %s630 = int_to_ptr.vmem [resolvable:$true] %s629
      %632 = dma.vmem_to_hbm [thread:$0]  %s630, 128, %s2, [#allocation4]
    $region21: #{tpu_custom_call.1} parent=1 // pred_fallthru
      _
    // Predicated region
    $region22: #{tpu_custom_call.1} parent=1 // pred_check
      _
    $region23: #{tpu_custom_call.1} parent=1 // pred_check_branch
      %634 = sbr.rel (0) target = $region25
    $region24: #{tpu_custom_call.1} parent=1 // pred_region
      %635 = dma.done [#allocation4], 128
    $region25: #{tpu_custom_call.1} parent=1 // pred_fallthru
      _
    %636 = vsyncpa [#allocation3], 1
    %637 = vsyncpa [#allocation6], 1
    %638 = vsyncpa [#allocation4], 1

</llo_original>
